<compile_context>
chip_gen: v7x
topology: tpu7x:2x2x1
jax: 0.10.0
libtpu: 0.0.40
codegen_flags: <defaults>
</compile_context>

<pallas_src>
import functools

import jax
import jax.numpy as jnp
from jax import lax
from jax.experimental import pallas as pl
from jax.experimental.pallas import tpu as pltpu


def _round_up(v, m):
    return (v + m - 1) // m * m


def _softmax_epilogue(h, o_ref, h_valid):
    """Bias/ReLU already applied to `h`; mask padded lanes, softmax, store."""
    h_pad = h.shape[1]
    if h_valid != h_pad:
        lane = lax.broadcasted_iota(jnp.int32, h.shape, 1)
        h = jnp.where(lane < h_valid, h, -jnp.inf)
    m = jnp.max(h, axis=1, keepdims=True)
    e = jnp.exp(h - m)
    denom = jnp.sum(e, axis=1, keepdims=True)
    # approx=True -> EUP vrcp slot (otherwise idle); ~1e-3 relative error.
    o_ref[...] = (e * pl.reciprocal(denom, approx=True)).astype(o_ref.dtype)


def _mlp_kernel_single_k(x_ref, w_ref, b_ref, o_ref, *, h_valid):
    # x_ref: [tb, D]   w_ref: [H_pad, D]   b_ref: [1, H_pad]   o_ref: [tb, H_pad]
    logits = lax.dot_general(
        x_ref[...],
        w_ref[...],
        dimension_numbers=(((1,), (1,)), ((), ())),
        preferred_element_type=jnp.float32,
    )
    h = jnp.maximum(logits + b_ref[...], 0.0)
    _softmax_epilogue(h, o_ref, h_valid)


def _mlp_kernel_multi_k(x_ref, w_ref, b_ref, o_ref, acc_ref, *, h_valid):
    # x_ref: [tb, tk]   w_ref: [H_pad, tk]   b_ref: [1, H_pad]
    # o_ref: [tb, H_pad] (constant over k)   acc_ref: [tb, H_pad] f32 scratch
    k = pl.program_id(1)

    @pl.when(k == 0)
    def _():
        # Seed the accumulator with the bias -> no bias add in the epilogue.
        acc_ref[...] = jnp.broadcast_to(b_ref[...], acc_ref.shape)

    # fc1 partial product: x[tb, tk] . w[H_pad, tk]^T (contract dim 1 of both;
    # no host-side transpose, the MXU takes the transposed RHS directly).
    acc_ref[...] += lax.dot_general(
        x_ref[...],
        w_ref[...],
        dimension_numbers=(((1,), (1,)), ((), ())),
        preferred_element_type=jnp.float32,
    )

    @pl.when(k == pl.num_programs(1) - 1)
    def _():
        h = jnp.maximum(acc_ref[...], 0.0)
        _softmax_epilogue(h, o_ref, h_valid)


def mlp_forward(x, weight, bias, *, tile_b=256, tile_k=512):
    """x: [B, D] f32; weight: [H, D] (PyTorch nn.Linear layout); bias: [H]."""
    B, D = x.shape
    H, Dw = weight.shape
    assert Dw == D and bias.shape == (H,)

    # Lane-dense hidden axis: pad H to a multiple of 128.
    h_pad = _round_up(H, 128)
    # Batch tile: multiple of 8 (f32 sublane); pad B up to a tile multiple.
    tb = min(tile_b, _round_up(B, 8))
    b_pad = _round_up(B, tb)
    # K tile: whole D if it fits a single tile, else 512-wide tiles (padded D).
    if D <= tile_k:
        tk, d_pad = D, D
    else:
        tk, d_pad = tile_k, _round_up(D, tile_k)
    n_k = d_pad // tk

    # Zero padding is semantically neutral (zeros contribute nothing to the
    # contraction; padded hidden lanes are masked in-kernel before softmax).
    xp = x if (b_pad, d_pad) == (B, D) else jnp.pad(
        x, ((0, b_pad - B), (0, d_pad - D)))
    wp = weight if (h_pad, d_pad) == (H, D) else jnp.pad(
        weight, ((0, h_pad - H), (0, d_pad - D)))
    bp = (bias if h_pad == H else jnp.pad(bias, (0, h_pad - H))).reshape(1, h_pad)

    cost = pl.CostEstimate(
        flops=2 * b_pad * d_pad * h_pad,
        transcendentals=b_pad * h_pad,
        bytes_accessed=4 * (b_pad * d_pad + h_pad * d_pad + b_pad * h_pad),
    )

    if n_k == 1:
        kernel = functools.partial(_mlp_kernel_single_k, h_valid=H)
        grid_spec = pltpu.PrefetchScalarGridSpec(
            num_scalar_prefetch=0,
            grid=(b_pad // tb,),
            in_specs=[
                pl.BlockSpec((tb, tk), lambda i: (i, 0)),        # x tile
                pl.BlockSpec((h_pad, tk), lambda i: (0, 0)),     # weight (resident)
                pl.BlockSpec((1, h_pad), lambda i: (0, 0)),      # bias (resident)
            ],
            out_specs=pl.BlockSpec((tb, h_pad), lambda i: (i, 0)),
            scratch_shapes=[],
        )
        dim_sem = ("parallel",)
    else:
        kernel = functools.partial(_mlp_kernel_multi_k, h_valid=H)
        grid_spec = pltpu.PrefetchScalarGridSpec(
            num_scalar_prefetch=0,
            grid=(b_pad // tb, n_k),
            in_specs=[
                pl.BlockSpec((tb, tk), lambda i, k: (i, k)),     # x tile
                pl.BlockSpec((h_pad, tk), lambda i, k: (0, k)),  # weight K-tile
                pl.BlockSpec((1, h_pad), lambda i, k: (0, 0)),   # bias (resident)
            ],
            out_specs=pl.BlockSpec((tb, h_pad), lambda i, k: (i, 0)),
            scratch_shapes=[pltpu.VMEM((tb, h_pad), jnp.float32)],
        )
        # batch axis parallel (megacore), K reduction arbitrary (innermost).
        dim_sem = ("parallel", "arbitrary")

    out = pl.pallas_call(
        kernel,
        out_shape=jax.ShapeDtypeStruct((b_pad, h_pad), jnp.float32),
        grid_spec=grid_spec,
        compiler_params=pltpu.CompilerParams(
            dimension_semantics=dim_sem,
            vmem_limit_bytes=64 * 1024 * 1024,
        ),
        cost_estimate=cost,
    )(xp, wp, bp)

    return out[:B, :H]


def _reference(x, weight, bias):
    logits = x @ weight.T + bias
    h = jnp.maximum(logits, 0.0)
    return jax.nn.softmax(h, axis=1)


if __name__ == "__main__":
    key = jax.random.PRNGKey(0)

    # --- Small shapes matching the module's forward (tfidf features -> hidden) ---
    batch = 8
    input_size = 32     # stand-in for tfidf feature dim
    hidden_size = 32    # stand-in for optuna best_params['hidden_size']

    kx, kw, kb = jax.random.split(key, 3)
    x = jax.random.normal(kx, (batch, input_size), dtype=jnp.float32)
    bound = 1.0 / (input_size ** 0.5)
    weight = jax.random.uniform(kw, (hidden_size, input_size),
                                minval=-bound, maxval=bound, dtype=jnp.float32)
    bias = jax.random.uniform(kb, (hidden_size,),
                              minval=-bound, maxval=bound, dtype=jnp.float32)

    out = mlp_forward(x, weight, bias)
    out = jax.block_until_ready(out)

    ref = _reference(x, weight, bias)
    assert out.shape == (batch, hidden_size)
    # approx reciprocal (EUP vrcp) has ~1e-3 relative error -> relaxed tolerance
    assert jnp.allclose(out, ref, atol=3e-3, rtol=3e-3)
    assert jnp.allclose(jnp.sum(out, axis=1), 1.0, atol=3e-3)

    # --- Larger shapes to exercise batch tiling, K tiling and H/D padding ---
    B2, D2, H2 = 512, 640, 200
    k2x, k2w, k2b = jax.random.split(jax.random.PRNGKey(1), 3)
    x2 = jax.random.normal(k2x, (B2, D2), dtype=jnp.float32)
    b2 = 1.0 / (D2 ** 0.5)
    w2 = jax.random.uniform(k2w, (H2, D2), minval=-b2, maxval=b2, dtype=jnp.float32)
    bi2 = jax.random.uniform(k2b, (H2,), minval=-b2, maxval=b2, dtype=jnp.float32)

    out2 = jax.block_until_ready(mlp_forward(x2, w2, bi2))
    ref2 = _reference(x2, w2, bi2)
    assert out2.shape == (B2, H2)
    assert jnp.allclose(out2, ref2, atol=3e-3, rtol=3e-3)
    assert jnp.allclose(jnp.sum(out2, axis=1), 1.0, atol=3e-3)

    print("KERNEL_OK")
</pallas_src>

<mosaic_0001>
module attributes {stable_mosaic.version = 11 : i64} {
  func.func @_mlp_kernel_single_k(%arg0: i32, %arg1: memref<8x32xf32, #tpu.memory_space<vmem>>, %arg2: memref<128x32xf32, #tpu.memory_space<vmem>>, %arg3: memref<1x128xf32, #tpu.memory_space<vmem>>, %arg4: memref<8x128xf32, #tpu.memory_space<vmem>>) attributes {dimension_semantics = [#tpu.dimension_semantics<parallel>], iteration_bounds = array<i64: 1>, scalar_prefetch = 0 : i64, scratch_operands = 0 : i64, tpu.core_type = #tpu.core_type<tc>, window_params = [{transform_indices = @transform_0, window_bounds = array<i64: 8, 32>}, {pipeline_mode = #tpu.pipeline_mode<synchronous>, transform_indices = @transform_1, window_bounds = array<i64: 128, 32>}, {pipeline_mode = #tpu.pipeline_mode<synchronous>, transform_indices = @transform_2, window_bounds = array<i64: 1, 128>}, {transform_indices = @transform_3, window_bounds = array<i64: 8, 128>}]} {
    %c0 = arith.constant 0 : index
    %c0_0 = arith.constant 0 : index
    %0 = vector.load %arg1[%c0, %c0_0] : memref<8x32xf32, #tpu.memory_space<vmem>>, vector<8x32xf32>
    %c0_1 = arith.constant 0 : index
    %c0_2 = arith.constant 0 : index
    %1 = vector.load %arg2[%c0_1, %c0_2] : memref<128x32xf32, #tpu.memory_space<vmem>>, vector<128x32xf32>
    %cst = arith.constant dense<0.000000e+00> : vector<8x128xf32>
    %2 = tpu.matmul %0, %1, %cst {dimension_numbers = #tpu.dot_dimension_numbers<[1], [1], [0], [0], [0, 0, 1, 0], [], []>} : vector<8x32xf32>, vector<128x32xf32>, vector<8x128xf32> -> vector<8x128xf32>
    %c0_3 = arith.constant 0 : index
    %c0_4 = arith.constant 0 : index
    %3 = vector.load %arg3[%c0_3, %c0_4] : memref<1x128xf32, #tpu.memory_space<vmem>>, vector<1x128xf32>
    %4 = vector.broadcast %3 : vector<1x128xf32> to vector<8x128xf32>
    %5 = arith.addf %2, %4 : vector<8x128xf32>
    %cst_5 = arith.constant 0.000000e+00 : f32
    %6 = vector.broadcast %cst_5 : f32 to vector<8x128xf32>
    %7 = arith.maximumf %5, %6 : vector<8x128xf32>
    %8 = tpu.iota {dimensions = array<i32: 1>} : vector<8x128xi32>
    %c32_i32 = arith.constant 32 : i32
    %9 = vector.broadcast %c32_i32 : i32 to vector<8x128xi32>
    %10 = arith.cmpi slt, %8, %9 : vector<8x128xi32>
    %cst_6 = arith.constant 0xFF800000 : f32
    %11 = vector.broadcast %cst_6 : f32 to vector<8x128xf32>
    %12 = arith.select %10, %7, %11 : vector<8x128xi1>, vector<8x128xf32>
    %cst_7 = arith.constant dense<0xFF800000> : vector<8xf32>
    %13 = vector.multi_reduction <maximumf>, %12, %cst_7 [1] : vector<8x128xf32> to vector<8xf32>
    %14 = vector.shape_cast %13 : vector<8xf32> to vector<8x1xf32>
    %15 = vector.broadcast %14 : vector<8x1xf32> to vector<8x128xf32>
    %16 = arith.subf %12, %15 : vector<8x128xf32>
    %17 = math.exp %16 : vector<8x128xf32>
    %cst_8 = arith.constant dense<0.000000e+00> : vector<8xf32>
    %18 = vector.multi_reduction <add>, %17, %cst_8 [1] : vector<8x128xf32> to vector<8xf32>
    %19 = vector.shape_cast %18 : vector<8xf32> to vector<8x1xf32>
    %20 = tpu.reciprocal %19 {approx = true} : vector<8x1xf32> -> vector<8x1xf32>
    %21 = vector.broadcast %20 : vector<8x1xf32> to vector<8x128xf32>
    %22 = arith.mulf %17, %21 : vector<8x128xf32>
    %c0_9 = arith.constant 0 : index
    %c0_10 = arith.constant 0 : index
    %23 = vector.load %arg4[%c0_9, %c0_10] : memref<8x128xf32, #tpu.memory_space<vmem>>, vector<8x128xf32>
    tpu.vector_store %arg4[%c0_9, %c0_10], %22 {strides = array<i32>} : memref<8x128xf32, #tpu.memory_space<vmem>>, vector<8x128xf32>,
    return
  }
  func.func @transform_0(%arg0: i32) -> (i32, i32) {
    %c0_i32 = arith.constant 0 : i32
    %c0_i32_0 = arith.constant 0 : i32
    return %arg0, %c0_i32 : i32, i32
  }
  func.func @transform_1(%arg0: i32) -> (i32, i32) {
    %c0_i32 = arith.constant 0 : i32
    %c0_i32_0 = arith.constant 0 : i32
    %c0_i32_1 = arith.constant 0 : i32
    return %c0_i32, %c0_i32_0 : i32, i32
  }
  func.func @transform_2(%arg0: i32) -> (i32, i32) {
    %c0_i32 = arith.constant 0 : i32
    %c0_i32_0 = arith.constant 0 : i32
    %c0_i32_1 = arith.constant 0 : i32
    return %c0_i32, %c0_i32_0 : i32, i32
  }
  func.func @transform_3(%arg0: i32) -> (i32, i32) {
    %c0_i32 = arith.constant 0 : i32
    %c0_i32_0 = arith.constant 0 : i32
    return %arg0, %c0_i32 : i32, i32
  }
}

</mosaic_0001>

<llo_original>
// kernel: tpu_custom_call.1
$region0: #{tpu_custom_call.1}
  #allocation0 [shape = 'u32[]', space=smem, size = 0x4, offset = 0x4, fixed_abs, tag = 'smem constant byte address 0x4 - core index']
  #allocation1 [shape = 'u32[144,128]{1,0:T(1,128)}', space=vmem, size = 0x12000, scoped, tag = 'internal scratch']
  %s0 = inlined_call_operand.hbm [shape: f32[8,32], index: 0, kind: input, shape index: {}]
  %s1 = inlined_call_operand.hbm [shape: f32[128,32], index: 1, kind: input, shape index: {}]
  %s2 = inlined_call_operand.hbm [shape: f32[1,128], index: 2, kind: input, shape index: {}]
  %s3 = inlined_call_operand.hbm [shape: f32[8,128], index: 3, kind: output, shape index: {}]
  %s4 = sld [smem:[#allocation0]]
  $region34: #{tpu_custom_call.1} parent=0
    _
  %s6 = ssub.s32 1, %s4
  %s7 = scalar_select 0, %s6, %s4
  $region1: #{tpu_custom_call.1} parent=0
    #allocation2 [shape = 'u8[4096]{0}', space=vmem, size = 0x1000, scoped, tag = 'input window, operand 0, single buffered']
    #allocation3 [shape = 's32[1]{0}', space=sflag, size = 0x4, scoped, tag = 'scoped memory for tpu_custom_call.1']
    #allocation4 [shape = 's32[1]{0}', space=sflag, size = 0x4, scoped, tag = 'scoped memory for tpu_custom_call.1']
    #allocation5 [shape = 'u8[65536]{0}', space=vmem, size = 0x10000, scoped, tag = 'input window, operand 1, single buffered']
    #allocation6 [shape = 's32[1]{0}', space=sflag, size = 0x4, scoped, tag = 'scoped memory for tpu_custom_call.1']
    #allocation7 [shape = 'u8[512]{0}', space=vmem, size = 0x400, scoped, tag = 'input window, operand 2, single buffered']
    #allocation8 [shape = 'u8[4096]{0}', space=vmem, size = 0x1000, scoped, tag = 'output window, operand 0, single buffered']
    %8 = vsyncpa [#allocation3], 0
    %9 = vsyncpa [#allocation6], 0
    %10 = vsyncpa [#allocation4], 0
    // Predicated region
    $region2: #{tpu_custom_call.1} parent=1 // pred_check
      _
    $region3: #{tpu_custom_call.1} parent=1 // pred_check_branch
      %12 = sbr.rel (0) target = $region5
    $region4: #{tpu_custom_call.1} parent=1 // pred_region
      %s14 = ssub.s32 128, 128
      %15 = vsyncadd [#allocation3], %s14
      %s17 = sshll.u32 [#allocation2], 4
      %s18 = int_to_ptr.vmem [resolvable:$true] %s17
      %20 = dma.hbm_to_vmem [thread:$0]  %s0, 128, %s18, [#allocation3]
    $region5: #{tpu_custom_call.1} parent=1 // pred_fallthru
      _
    // Predicated region
    $region6: #{tpu_custom_call.1} parent=1 // pred_check
      _
    $region7: #{tpu_custom_call.1} parent=1 // pred_check_branch
      %22 = sbr.rel (0) target = $region9
    $region8: #{tpu_custom_call.1} parent=1 // pred_region
      %s24 = ssub.s32 2048, 2048
      %25 = vsyncadd [#allocation6], %s24
      %s26 = sshll.u32 [#allocation5], 4
      %s27 = int_to_ptr.vmem [resolvable:$true] %s26
      %32 = dma.hbm_to_vmem [thread:$0]  %s1, 2048, %s27, [#allocation6], 128, 128, 8
    $region9: #{tpu_custom_call.1} parent=1 // pred_fallthru
      _
    // Predicated region
    $region10: #{tpu_custom_call.1} parent=1 // pred_check
      _
    $region11: #{tpu_custom_call.1} parent=1 // pred_check_branch
      %34 = sbr.rel (0) target = $region13
    $region12: #{tpu_custom_call.1} parent=1 // pred_region
      %s36 = ssub.s32 16, 16
      %37 = vsyncadd [#allocation6], %s36
      %s39 = sshll.u32 [#allocation7], 4
      %s40 = int_to_ptr.vmem [resolvable:$true] %s39
      %42 = dma.hbm_to_vmem [thread:$0]  %s2, 16, %s40, [#allocation6]
    $region13: #{tpu_custom_call.1} parent=1 // pred_fallthru
      _
    // Predicated region
    $region14: #{tpu_custom_call.1} parent=1 // pred_check
      _
    $region15: #{tpu_custom_call.1} parent=1 // pred_check_branch
      %44 = sbr.rel (0) target = $region17
    $region16: #{tpu_custom_call.1} parent=1 // pred_region
      %45 = dma.done [#allocation3], 128
    $region17: #{tpu_custom_call.1} parent=1 // pred_fallthru
      _
    // Predicated region
    $region18: #{tpu_custom_call.1} parent=1 // pred_check
      _
    $region19: #{tpu_custom_call.1} parent=1 // pred_check_branch
      %47 = sbr.rel (0) target = $region21
    $region20: #{tpu_custom_call.1} parent=1 // pred_region
      %48 = dma.done [#allocation6], 2048
    $region21: #{tpu_custom_call.1} parent=1 // pred_fallthru
      _
    // Predicated region
    $region22: #{tpu_custom_call.1} parent=1 // pred_check
      _
    $region23: #{tpu_custom_call.1} parent=1 // pred_check_branch
      %50 = sbr.rel (0) target = $region25
    $region24: #{tpu_custom_call.1} parent=1 // pred_region
      %51 = dma.done [#allocation6], 16
    $region25: #{tpu_custom_call.1} parent=1 // pred_fallthru
      _
    %v52 = vld [vmem:[#allocation2] sm:$0xff]
    %v53 = vld [vmem:[#allocation5] sm:$0xff]
    %v54 = vld [vmem:[#allocation5 + $0x8] sm:$0xff]
    %v55 = vld [vmem:[#allocation5 + $0x10] sm:$0xff]
    %v56 = vld [vmem:[#allocation5 + $0x18] sm:$0xff]
    %v57 = vld [vmem:[#allocation5 + $0x20] sm:$0xff]
    %v58 = vld [vmem:[#allocation5 + $0x28] sm:$0xff]
    %v59 = vld [vmem:[#allocation5 + $0x30] sm:$0xff]
    %v60 = vld [vmem:[#allocation5 + $0x38] sm:$0xff]
    %v61 = vld [vmem:[#allocation5 + $0x40] sm:$0xff]
    %v62 = vld [vmem:[#allocation5 + $0x48] sm:$0xff]
    %v63 = vld [vmem:[#allocation5 + $0x50] sm:$0xff]
    %v64 = vld [vmem:[#allocation5 + $0x58] sm:$0xff]
    %v65 = vld [vmem:[#allocation5 + $0x60] sm:$0xff]
    %v66 = vld [vmem:[#allocation5 + $0x68] sm:$0xff]
    %v67 = vld [vmem:[#allocation5 + $0x70] sm:$0xff]
    %v68 = vld [vmem:[#allocation5 + $0x78] sm:$0xff]
    %v69 = vld [vmem:[#allocation7] sm:$0x1]
    %v71 = vlaneseq
    %v72 = vshrl.u32 %v71, 7
    %v73 = vsub.s32 0, %v72
    %v74 = vrot.slane %v69, %v73
    %vm76 = vcmask 261120
    %v78 = vsel %vm76, %v52, 0
    %v81 = vsel %vm76, %v53, 0
    %v84 = vsel %vm76, %v54, 0
    %v87 = vsel %vm76, %v55, 0
    %v90 = vsel %vm76, %v56, 0
    %v93 = vsel %vm76, %v57, 0
    %v96 = vsel %vm76, %v58, 0
    %v99 = vsel %vm76, %v59, 0
    %v102 = vsel %vm76, %v60, 0
    %v105 = vsel %vm76, %v61, 0
    %v108 = vsel %vm76, %v62, 0
    %v111 = vsel %vm76, %v63, 0
    %v114 = vsel %vm76, %v64, 0
    %v117 = vsel %vm76, %v65, 0
    %v120 = vsel %vm76, %v66, 0
    %v123 = vsel %vm76, %v67, 0
    %v126 = vsel %vm76, %v68, 0
    %128 = vmatprep.subr.mxu0 0.0
    %129 = vmatpush1.xpose.msra.mxu0 %v81
    %130 = vmatprep.subr.mxu0 0.0
    %131 = vmatpush1.xpose.msra.mxu0 %v84
    %132 = vmatprep.subr.mxu0 0.0
    %133 = vmatpush1.xpose.msra.mxu0 %v87
    %134 = vmatprep.subr.mxu0 0.0
    %135 = vmatpush1.xpose.msra.mxu0 %v90
    %136 = vmatprep.subr.mxu0 0.0
    %137 = vmatpush1.xpose.msra.mxu0 %v93
    %138 = vmatprep.subr.mxu0 0.0
    %139 = vmatpush1.xpose.msra.mxu0 %v96
    %140 = vmatprep.subr.mxu0 0.0
    %141 = vmatpush1.xpose.msra.mxu0 %v99
    %142 = vmatprep.subr.mxu0 0.0
    %143 = vmatpush1.xpose.msra.mxu0 %v102
    %144 = vmatprep.subr.mxu0 0.0
    %145 = vmatpush1.xpose.msra.mxu0 %v105
    %146 = vmatprep.subr.mxu0 0.0
    %147 = vmatpush1.xpose.msra.mxu0 %v108
    %148 = vmatprep.subr.mxu0 0.0
    %149 = vmatpush1.xpose.msra.mxu0 %v111
    %150 = vmatprep.subr.mxu0 0.0
    %151 = vmatpush1.xpose.msra.mxu0 %v114
    %152 = vmatprep.subr.mxu0 0.0
    %153 = vmatpush1.xpose.msra.mxu0 %v117
    %154 = vmatprep.subr.mxu0 0.0
    %155 = vmatpush1.xpose.msra.mxu0 %v120
    %156 = vmatprep.subr.mxu0 0.0
    %157 = vmatpush1.xpose.msra.mxu0 %v123
    %158 = vmatprep.subr.mxu0 0.0
    %159 = vmatpush1.xpose.msra.mxu0 %v126
    %160 = vmatprep.subr.mxu0 0.0
    %161 = vmatpush1.xpose.msra.mxu0 0.0
    %162 = vmatprep.subr.mxu0 0.0
    %163 = vmatpush1.xpose.msra.mxu0 0.0
    %164 = vmatprep.subr.mxu0 0.0
    %165 = vmatpush1.xpose.msra.mxu0 0.0
    %166 = vmatprep.subr.mxu0 0.0
    %167 = vmatpush1.xpose.msra.mxu0 0.0
    %168 = vmatprep.subr.mxu0 0.0
    %169 = vmatpush1.xpose.msra.mxu0 0.0
    %170 = vmatprep.subr.mxu0 0.0
    %171 = vmatpush1.xpose.msra.mxu0 0.0
    %172 = vmatprep.subr.mxu0 0.0
    %173 = vmatpush1.xpose.msra.mxu0 0.0
    %174 = vmatprep.subr.mxu0 0.0
    %175 = vmatpush1.xpose.msra.mxu0 0.0
    %176 = vmatprep.subr.mxu0 0.0
    %177 = vmatpush1.xpose.msra.mxu0 0.0
    %178 = vmatprep.subr.mxu0 0.0
    %179 = vmatpush1.xpose.msra.mxu0 0.0
    %180 = vmatprep.subr.mxu0 0.0
    %181 = vmatpush1.xpose.msra.mxu0 0.0
    %182 = vmatprep.subr.mxu0 0.0
    %183 = vmatpush1.xpose.msra.mxu0 0.0
    %184 = vmatprep.subr.mxu0 0.0
    %185 = vmatpush1.xpose.msra.mxu0 0.0
    %186 = vmatprep.subr.mxu0 0.0
    %187 = vmatpush1.xpose.msra.mxu0 0.0
    %188 = vmatprep.subr.mxu0 0.0
    %189 = vmatpush1.xpose.msra.mxu0 0.0
    %190 = vmatprep.subr.mxu0 0.0
    %191 = vmatpush1.xpose.msra.mxu0 0.0
    %192 = vmatprep.mubr.f32.mxu0 0.0
    %193 = vmatmul.mubr.f32.gmra.mrb[0].mxu0 %v78
    %v194 = vpop.f32.mrb[0].mxu0
    %v195 = vadd.f32 %v74, %v194
    %v196 = vpop.f32.mrb[0].mxu0
    %197 = vdwg.mxu0
    %v198 = vmax.f32 %v195, 0.0
    %v199 = vlaneseq
    %v200 = vand.u32 %v199, 127
    %vm201 = vcmp.lt.s32.totalorder %v200, 32
    %v202 = vsel %vm201, %v198, -inf
    %203 = vmax.xlane.f32.xlu0 %v202
    %v204 = vpop.xlane.xlu0 %203
    %v205 = vsub.f32 %v202, %v204
    %v206 = vmul.f32 %v205, 1.442695
    %v207 = vpow.pop %v206
    %208 = vadd.xlane.f32.xlu0 %v207
    %v209 = vpop.xlane.xlu0 %208
    %v210 = vrcp.pop %v209
    %v211 = vmul.f32 %v207, %v210
    %212 = vst [vmem:[#allocation8] sm:$0xff] %v211
    // Predicated region
    $region26: #{tpu_custom_call.1} parent=1 // pred_check
      _
    $region27: #{tpu_custom_call.1} parent=1 // pred_check_branch
      %214 = sbr.rel (0) target = $region29
    $region28: #{tpu_custom_call.1} parent=1 // pred_region
      %s216 = ssub.s32 128, 128
      %217 = vsyncadd [#allocation4], %s216
      %s219 = sshll.u32 [#allocation8], 4
      %s220 = int_to_ptr.vmem [resolvable:$true] %s219
      %222 = dma.vmem_to_hbm [thread:$0]  %s220, 128, %s3, [#allocation4]
    $region29: #{tpu_custom_call.1} parent=1 // pred_fallthru
      _
    // Predicated region
    $region30: #{tpu_custom_call.1} parent=1 // pred_check
      _
    $region31: #{tpu_custom_call.1} parent=1 // pred_check_branch
      %224 = sbr.rel (0) target = $region33
    $region32: #{tpu_custom_call.1} parent=1 // pred_region
      %225 = dma.done [#allocation4], 128
    $region33: #{tpu_custom_call.1} parent=1 // pred_fallthru
      _
    %226 = vsyncpa [#allocation3], 1
    %227 = vsyncpa [#allocation6], 1
    %228 = vsyncpa [#allocation4], 1

</llo_original>
